<compile_context>
chip_gen: v6e
topology: v6e:2x2x1
jax: 0.10.0
libtpu: 0.0.40
codegen_flags: <defaults>
</compile_context>

<pallas_src>
import functools

import jax
import jax.numpy as jnp
from jax import lax
from jax.experimental import pallas as pl
from jax.experimental.pallas import tpu as pltpu

_F32 = jnp.float32
_MIB = 1024 * 1024


# ---------------------------------------------------------------------------
# planning helpers
# ---------------------------------------------------------------------------
def _round_up(x, m):
    return (x + m - 1) // m * m


def _vmem_limit_bytes():
    """Per-generation scoped-VMEM budget (96 MiB on 128-MiB parts, 48 MiB on v7x)."""
    cap = 64 * _MIB                       # conservative default if the query fails
    try:
        cap = int(getattr(pltpu.get_tpu_info(), "vmem_capacity_bytes", cap))
    except Exception:
        pass
    return max(32 * _MIB, min(int(0.75 * cap), 96 * _MIB))


def _plan_k_tiling(n_rows, mask_rows, k_cols, x_itemsize, m_itemsize,
                   max_tk, vmem_limit, want_core_split):
    """Pick (tk, nc, kpc, k_pad): lane-aligned K tile, #partials, K tiles per
    partial, and the zero-padded K.  K is padded to nc * kpc * tk so the tile
    size is chosen by VMEM budget, not by K's divisors."""
    per_col = 2 * n_rows * x_itemsize + 2 * mask_rows * m_itemsize  # dbl-buffered streams
    fixed = 2 * n_rows * n_rows * 4 + 2 * _MIB                      # resident partial + slack
    budget = max(int(0.6 * vmem_limit) - fixed, per_col * 128)
    tk = (budget // per_col) // 128 * 128
    tk = max(128, min(tk, _round_up(max_tk, 128), _round_up(k_cols, 128)))
    n_tiles = -(-k_cols // tk)
    nc = 2 if (want_core_split and n_tiles >= 2) else 1
    kpc = -(-n_tiles // nc)
    return tk, nc, kpc, nc * kpc * tk


def _pad_cols(x2d, k_pad):
    k = x2d.shape[1]
    return x2d if k == k_pad else jnp.pad(x2d, ((0, 0), (0, k_pad - k)))


# ---------------------------------------------------------------------------
# kernels
# ---------------------------------------------------------------------------
def _apply_compact_mask(x, m, a, b):
    """Mask (a*b, tk) features with a compact (a, tk) mask (one row per batch).

    Each mask row is broadcast over its b channel rows via a sublane-broadcast
    multiply; no (a*b, tk) expanded-mask array is materialized.  Runs in the
    feature dtype (the 0/1 mask multiply is exact in bf16).
    """
    m = m.astype(x.dtype)
    if a == 1:
        return x * m
    parts = [x[i * b:(i + 1) * b, :] * m[i:i + 1, :] for i in range(a)]
    return jnp.concatenate(parts, axis=0)


def _gram_partial_kernel(x_ref, pg_ref, *, inv_denom):
    # grid = (nc, kpc); axis 1 is the K reduction ("arbitrary"), axis 0 the
    # partial-gram split ("parallel" -> one partial per TensorCore on v7x).
    k = pl.program_id(1)

    @pl.when(k == 0)
    def _init():
        pg_ref[...] = jnp.zeros_like(pg_ref)

    f = x_ref[...]                                   # native dtype (bf16 stays bf16)
    # TODO(synk): verify via pl.lower_as_mlir that the dim-1/dim-1 contraction
    #             does not emit a per-step vxpose stealing MXU issue bandwidth.
    pg_ref[...] += lax.dot_general(
        f, f, dimension_numbers=(((1,), (1,)), ((), ())),
        preferred_element_type=_F32)

    @pl.when(k == pl.num_programs(1) - 1)
    def _scale():
        pg_ref[...] = pg_ref[...] * inv_denom        # .div(a*b*c*d)


def _masked_gram_partial_kernel(x_ref, m_ref, pg_ref, *, a, b, inv_denom):
    k = pl.program_id(1)

    @pl.when(k == 0)
    def _init():
        pg_ref[...] = jnp.zeros_like(pg_ref)

    f = _apply_compact_mask(x_ref[...], m_ref[...], a, b)
    pg_ref[...] += lax.dot_general(
        f, f, dimension_numbers=(((1,), (1,)), ((), ())),
        preferred_element_type=_F32)

    @pl.when(k == pl.num_programs(1) - 1)
    def _scale():
        pg_ref[...] = pg_ref[...] * inv_denom


def _style_epilogue_kernel(pg_ref, t_ref, ms_ref, g_ref, loss_ref, *, nc, weight):
    # Combine the per-core partial grams (already scaled by 1/(a*b*c*d)).
    G = pg_ref[0]
    for i in range(1, nc):
        G = G + pg_ref[i]
    g_ref[...] = G                                    # gram_matrix(input * mask)

    # torch: G.div(mask.sum()) is discarded; target.div(mask.sum()) IS used.
    inv_ms = pl.reciprocal(ms_ref[...], approx=False)  # (1,1); inf if mask empty (same as torch)
    diff = G - t_ref[...].astype(_F32) * inv_ms
    loss_ref[0, 0] = jnp.mean(diff * diff) * weight    # F.mse_loss * weight


# ---------------------------------------------------------------------------
# wrappers
# ---------------------------------------------------------------------------
def gram_matrix(x_nchw, *, max_tk=8192):
    """G = (X.view(a*b, c*d) @ X.view(a*b, c*d).T) / (a*b*c*d)  (f32 output)."""
    a, b, c, d = x_nchw.shape
    n, K = a * b, c * d
    feats = x_nchw.reshape(n, K)                      # free HBM reshape, native dtype
    vmem_limit = _vmem_limit_bytes()
    tk, nc, kpc, k_pad = _plan_k_tiling(
        n, 0, K, feats.dtype.itemsize, 0, max_tk, vmem_limit, want_core_split=False)
    feats = _pad_cols(feats, k_pad)

    cost = pl.CostEstimate(
        flops=2 * n * n * k_pad, transcendentals=0,
        bytes_accessed=n * k_pad * feats.dtype.itemsize + nc * n * n * 4)

    g = pl.pallas_call(
        functools.partial(_gram_partial_kernel, inv_denom=1.0 / float(n * K)),
        out_shape=jax.ShapeDtypeStruct((nc, n, n), _F32),
        grid=(nc, kpc),
        in_specs=[pl.BlockSpec((n, tk), lambda c_, k_: (0, c_ * kpc + k_))],
        out_specs=pl.BlockSpec((None, n, n), lambda c_, k_: (c_, 0, 0)),
        compiler_params=pltpu.CompilerParams(
            dimension_semantics=("parallel", "arbitrary"),
            vmem_limit_bytes=vmem_limit),
        cost_estimate=cost,
    )(feats)
    return g.reshape(n, n)        # nc == 1 on this one-time init path; reshape is free


def style_loss_forward(x_nchw, mask1, target_gram, weight, *, max_tk=8192):
    """mask * input -> gram (K-tiled, per-core partials) -> MSE vs target/mask.sum().

    mask1 has shape (a, 1, c, d) (compact mask).  Returns (G, loss, mask_sum).
    """
    a, b, c, d = x_nchw.shape
    n, K = a * b, c * d
    x2 = x_nchw.reshape(n, K)                         # native dtype (bf16 stays bf16)
    m2 = mask1.reshape(a, K)                          # compact: 1/b of the mask HBM traffic

    # torch's mask.expand_as(input).sum() == b * compact_mask.sum().  Computed
    # once here (tiny) instead of a per-step XLU reduce inside the hot loop.
    mask_sum = (jnp.sum(m2, dtype=_F32) * float(b)).reshape(1, 1)

    vmem_limit = _vmem_limit_bytes()
    tk, nc, kpc, k_pad = _plan_k_tiling(
        n, a, K, x2.dtype.itemsize, m2.dtype.itemsize,
        max_tk, vmem_limit, want_core_split=True)
    x2 = _pad_cols(x2, k_pad)
    m2 = _pad_cols(m2, k_pad)

    cost = pl.CostEstimate(
        flops=2 * n * n * k_pad + 2 * n * k_pad,
        transcendentals=0,
        bytes_accessed=(n * k_pad * x2.dtype.itemsize
                        + a * k_pad * m2.dtype.itemsize + nc * n * n * 4))

    # Pass 1: per-core partial grams over disjoint K ranges.
    partials = pl.pallas_call(
        functools.partial(_masked_gram_partial_kernel, a=a, b=b,
                          inv_denom=1.0 / float(n * K)),
        out_shape=jax.ShapeDtypeStruct((nc, n, n), _F32),
        grid=(nc, kpc),
        in_specs=[
            # TODO(synk): sweep pipeline_mode=pl.Buffered(3) on the x spec once a
            #             bundle dump confirms DMA is still exposed at large tk.
            pl.BlockSpec((n, tk), lambda c_, k_: (0, c_ * kpc + k_)),
            pl.BlockSpec((a, tk), lambda c_, k_: (0, c_ * kpc + k_)),
        ],
        out_specs=pl.BlockSpec((None, n, n), lambda c_, k_: (c_, 0, 0)),
        compiler_params=pltpu.CompilerParams(
            dimension_semantics=("parallel", "arbitrary"),
            vmem_limit_bytes=vmem_limit),
        cost_estimate=cost,
    )(x2, m2)

    # Pass 2 (cheap, single step): combine partials + MSE against target/mask.sum().
    # The target gram only lives in VMEM here, never in the hot-loop working set.
    G, loss = pl.pallas_call(
        functools.partial(_style_epilogue_kernel, nc=nc, weight=float(weight)),
        out_shape=(jax.ShapeDtypeStruct((n, n), _F32),
                   jax.ShapeDtypeStruct((1, 1), _F32)),
        grid=(1,),
        in_specs=[pl.BlockSpec((nc, n, n), lambda i: (0, 0, 0)),
                  pl.BlockSpec((n, n), lambda i: (0, 0)),
                  pl.BlockSpec((1, 1), lambda i: (0, 0))],
        out_specs=(pl.BlockSpec((n, n), lambda i: (0, 0)),
                   pl.BlockSpec(memory_space=pltpu.MemorySpace.SMEM)),
        compiler_params=pltpu.CompilerParams(
            dimension_semantics=("arbitrary",),
            vmem_limit_bytes=vmem_limit),
    )(partials, target_gram, mask_sum)

    return G, loss[0, 0], mask_sum[0, 0]


# ---------------------------------------------------------------------------
# Module-equivalent wrapper (matches torch StyleLoss forward semantics)
# ---------------------------------------------------------------------------
class StyleLoss:
    def __init__(self, target, mask, weight, *, max_tk=8192):
        self.target = gram_matrix(target, max_tk=max_tk)   # detached target gram
        self.mask = jnp.asarray(mask)
        self.weight = float(weight)
        self.max_tk = max_tk
        self.loss = 0.0
        self.G = None

    def __call__(self, x):
        # torch: self.mask = self.mask[:, 0:1, :, :]; then .expand_as(input).
        # We keep the compact (a, 1, h, w) slice and broadcast over the channel
        # rows inside the kernel (mathematically identical, b x less HBM traffic).
        mask1 = self.mask[:, 0:1, :, :]
        self.mask = mask1

        G, loss, mask_sum = style_loss_forward(
            x, mask1, self.target, self.weight, max_tk=self.max_tk)
        self.G = G
        # torch: G.div(mask.sum()) result is discarded (not in-place), while
        #        self.target = self.target.div(mask.sum()) IS kept.
        self.target = self.target / mask_sum
        self.loss = loss
        return x

    # TODO(synk): style_hook rewrites backward gradients; only the forward pass
    #             is implemented here (no Pallas equivalent of a grad hook).


# ---------------------------------------------------------------------------
def _reference(x, target_fm, mask, weight):
    a, b, c, d = x.shape
    n, K = a * b, c * d
    f_t = target_fm.reshape(n, K).astype(jnp.float32)
    tgt = (f_t @ f_t.T) / (n * K)
    m_exp = jnp.broadcast_to(mask[:, 0:1, :, :], x.shape).astype(jnp.float32)
    f_x = (x.astype(jnp.float32) * m_exp).reshape(n, K)
    G = (f_x @ f_x.T) / (n * K)
    ms = jnp.sum(m_exp)
    loss = jnp.mean((G - tgt / ms) ** 2) * weight
    return G, loss, tgt / ms


def _run_case(shape, weight, max_tk):
    a, b, c, d = shape
    k1, k2, k3 = jax.random.split(jax.random.PRNGKey(0), 3)
    target_fm = jax.random.normal(k1, shape, jnp.float32)
    mask = (jax.random.uniform(k2, shape) > 0.5).astype(jnp.float32)
    x = jax.random.normal(k3, shape, jnp.float32)

    module = StyleLoss(target_fm, mask, weight, max_tk=max_tk)
    out = module(x)
    jax.block_until_ready((out, module.loss, module.G, module.target))

    G_ref, loss_ref, tgt_scaled_ref = _reference(x, target_fm, mask, weight)
    assert jnp.allclose(out, x), shape
    assert jnp.allclose(module.G, G_ref, rtol=1e-5, atol=1e-5), shape
    assert jnp.allclose(module.loss, loss_ref, rtol=1e-4, atol=1e-5), shape
    assert jnp.allclose(module.target, tgt_scaled_ref, rtol=1e-5, atol=1e-6), shape


if __name__ == "__main__":
    # max_tk=128 forces multi-tile K grids at these small shapes, exercising the
    # parallel partial-gram split, the K-accumulation init path and K padding.
    _run_case((2, 4, 16, 16), weight=1000.0, max_tk=128)   # K=256: 2 tiles -> 2 partials
    _run_case((2, 4, 16, 17), weight=10.0, max_tk=128)     # K=272: zero-padded to 512
    print("KERNEL_OK")
</pallas_src>

<mosaic_0001>
module attributes {stable_mosaic.version = 11 : i64} {
  func.func @_gram_partial_kernel(%arg0: i32, %arg1: i32, %arg2: memref<8x128xf32, #tpu.memory_space<vmem>>, %arg3: memref<1x8x8xf32, #tpu.memory_space<vmem>>) attributes {dimension_semantics = [#tpu.dimension_semantics<parallel>, #tpu.dimension_semantics<arbitrary>], iteration_bounds = array<i64: 1, 2>, scalar_prefetch = 0 : i64, scratch_operands = 0 : i64, tpu.core_type = #tpu.core_type<tc>, window_params = [{transform_indices = @transform_0, window_bounds = array<i64: 8, 128>}, {transform_indices = @transform_1, window_bounds = array<i64: 1, 8, 8>}]} {
    %c0_i32 = arith.constant 0 : i32
    %0 = arith.cmpi eq, %arg1, %c0_i32 : i32
    %1 = arith.extui %0 : i1 to i32
    %c0_i32_0 = arith.constant 0 : i32
    %2 = arith.cmpi ne, %1, %c0_i32_0 : i32
    scf.if %2 {
      %cst_9 = arith.constant 0.000000e+00 : f32
      %14 = vector.broadcast %cst_9 : f32 to vector<8x8xf32>
      %c0_10 = arith.constant 0 : index
      %c0_11 = arith.constant 0 : index
      %c0_12 = arith.constant 0 : index
      %15 = vector.load %arg3[%c0_10, %c0_11, %c0_12] : memref<1x8x8xf32, #tpu.memory_space<vmem>>, vector<1x8x8xf32>
      %16 = vector.shape_cast %15 : vector<1x8x8xf32> to vector<8x8xf32>
      %17 = vector.shape_cast %14 : vector<8x8xf32> to vector<1x8x8xf32>
      tpu.vector_store %arg3[%c0_10, %c0_11, %c0_12], %17 {strides = array<i32>} : memref<1x8x8xf32, #tpu.memory_space<vmem>>, vector<1x8x8xf32>,
    } else {
    }
    %c0 = arith.constant 0 : index
    %c0_1 = arith.constant 0 : index
    %3 = vector.load %arg2[%c0, %c0_1] : memref<8x128xf32, #tpu.memory_space<vmem>>, vector<8x128xf32>
    %c0_2 = arith.constant 0 : index
    %c0_3 = arith.constant 0 : index
    %c0_4 = arith.constant 0 : index
    %4 = vector.load %arg3[%c0_2, %c0_3, %c0_4] : memref<1x8x8xf32, #tpu.memory_space<vmem>>, vector<1x8x8xf32>
    %5 = vector.shape_cast %4 : vector<1x8x8xf32> to vector<8x8xf32>
    %cst = arith.constant dense<0.000000e+00> : vector<8x8xf32>
    %6 = tpu.matmul %3, %3, %cst {dimension_numbers = #tpu.dot_dimension_numbers<[1], [1], [0], [0], [0, 0, 1, 0], [], []>} : vector<8x128xf32>, vector<8x128xf32>, vector<8x8xf32> -> vector<8x8xf32>
    %7 = arith.addf %5, %6 : vector<8x8xf32>
    %c0_5 = arith.constant 0 : index
    %c0_6 = arith.constant 0 : index
    %c0_7 = arith.constant 0 : index
    %8 = vector.load %arg3[%c0_5, %c0_6, %c0_7] : memref<1x8x8xf32, #tpu.memory_space<vmem>>, vector<1x8x8xf32>
    %9 = vector.shape_cast %8 : vector<1x8x8xf32> to vector<8x8xf32>
    %10 = vector.shape_cast %7 : vector<8x8xf32> to vector<1x8x8xf32>
    tpu.vector_store %arg3[%c0_5, %c0_6, %c0_7], %10 {strides = array<i32>} : memref<1x8x8xf32, #tpu.memory_space<vmem>>, vector<1x8x8xf32>,
    %c1_i32 = arith.constant 1 : i32
    %11 = arith.cmpi eq, %arg1, %c1_i32 : i32
    %12 = arith.extui %11 : i1 to i32
    %c0_i32_8 = arith.constant 0 : i32
    %13 = arith.cmpi ne, %12, %c0_i32_8 : i32
    scf.if %13 {
      %c0_9 = arith.constant 0 : index
      %c0_10 = arith.constant 0 : index
      %c0_11 = arith.constant 0 : index
      %14 = vector.load %arg3[%c0_9, %c0_10, %c0_11] : memref<1x8x8xf32, #tpu.memory_space<vmem>>, vector<1x8x8xf32>
      %15 = vector.shape_cast %14 : vector<1x8x8xf32> to vector<8x8xf32>
      %cst_12 = arith.constant 4.8828125E-4 : f32
      %16 = vector.broadcast %cst_12 : f32 to vector<8x8xf32>
      %17 = arith.mulf %15, %16 : vector<8x8xf32>
      %c0_13 = arith.constant 0 : index
      %c0_14 = arith.constant 0 : index
      %c0_15 = arith.constant 0 : index
      %18 = vector.load %arg3[%c0_13, %c0_14, %c0_15] : memref<1x8x8xf32, #tpu.memory_space<vmem>>, vector<1x8x8xf32>
      %19 = vector.shape_cast %18 : vector<1x8x8xf32> to vector<8x8xf32>
      %20 = vector.shape_cast %17 : vector<8x8xf32> to vector<1x8x8xf32>
      tpu.vector_store %arg3[%c0_13, %c0_14, %c0_15], %20 {strides = array<i32>} : memref<1x8x8xf32, #tpu.memory_space<vmem>>, vector<1x8x8xf32>,
    } else {
    }
    return
  }
  func.func @transform_0(%arg0: i32, %arg1: i32) -> (i32, i32) {
    %c2_i32 = arith.constant 2 : i32
    %0 = arith.muli %arg0, %c2_i32 : i32
    %1 = arith.addi %0, %arg1 : i32
    %c0_i32 = arith.constant 0 : i32
    %c0_i32_0 = arith.constant 0 : i32
    return %c0_i32, %1 : i32, i32
  }
  func.func @transform_1(%arg0: i32, %arg1: i32) -> (i32, i32, i32) {
    %c0_i32 = arith.constant 0 : i32
    %c0_i32_0 = arith.constant 0 : i32
    %c0_i32_1 = arith.constant 0 : i32
    return %arg0, %c0_i32, %c0_i32_0 : i32, i32, i32
  }
}

</mosaic_0001>

<llo_original>
// kernel: tpu_custom_call.1
$region0: #{tpu_custom_call.1}
  #allocation0 [shape = 'u32[]', space=smem, size = 0x4, offset = 0x4, fixed_abs, tag = 'smem constant byte address 0x4 - core index']
  #allocation1 [shape = 'u32[144,128]{1,0:T(1,128)}', space=vmem, size = 0x12000, scoped, tag = 'internal scratch']
  %s0 = inlined_call_operand.hbm [shape: f32[8,256], index: 0, kind: input, shape index: {}]
  %s1 = inlined_call_operand.hbm [shape: f32[1,8,8], index: 1, kind: output, shape index: {}]
  %s2 = sld [smem:[#allocation0]]
  $region49: #{tpu_custom_call.1} parent=0
    _
  %s4 = ssub.s32 1, %s2
  %s5 = scalar_select 0, %s4, %s2
  $region1: #{tpu_custom_call.1} parent=0
    #allocation2 [shape = 'u8[8192]{0}', space=vmem, size = 0x2000, scoped, tag = 'input window, operand 0']
    #allocation3 [shape = 's32[2]{0}', space=sflag, size = 0x8, scoped, tag = 'scoped memory for tpu_custom_call.1']
    #allocation4 [shape = 's32[2]{0}', space=sflag, size = 0x8, scoped, tag = 'scoped memory for tpu_custom_call.1']
    #allocation5 [shape = 'u8[4096]{0}', space=vmem, size = 0x1000, scoped, tag = 'output window, operand 0, single buffered']
    %6 = vsyncpa [#allocation3], 0
    %s7 = scalar_lea.sflag [#allocation3], 1
    %8 = vsyncpa %s7, 0
    %9 = vsyncpa [#allocation4], 0
    loop: start=0, step=1, limit=4
    $region2: #{tpu_custom_call.1} parent=1 // loop_pre_header
      _
    $region3: #{tpu_custom_call.1} parent=1 // loop_header
      %s11 = sphi 0, %s15
      %p12 = scmp.ge.s32.totalorder %s11, 4
      %s18 = sphi 0, %s30
      %s19 = sphi 0, %s26
      %s20 = sphi 0, %s18
      %s21 = sphi 0, %s19
      %s22 = sphi 0, %s20
      %s23 = sphi 0, %s21
      %s37 = sphi 0, %s39
      %s40 = sphi 0, %s37
      %s41 = sphi 0, %s40
      %s57 = sphi 0, %s41
      %s63 = sphi 0, %s65
      %s66 = sphi 0, %s63
      %s67 = sphi 0, %s66
      %s83 = sphi 0, %s67
    $region4: #{tpu_custom_call.1} parent=1 // loop_header_branch
      %14 = sbr.rel (%p12) target = $region8
    $region5: #{tpu_custom_call.1} parent=1 // loop_body
      %s16 = ssub.s32 %s11, 1
      %s17 = ssub.s32 %s11, 2
      %s24 = sadd.s32 1, %s19
      %p25 = scmp.ge.s32.totalorder %s24, 2
      %s26 = scalar_select %p25, 0, %s24
      %s27 = sadd.s32 1, %s18
      %s28 = scalar_select %p25, %s27, %s18
      %p29 = scmp.ge.s32.totalorder %s28, 1
      %s30 = scalar_select %p29, 0, %s28
      %s31 = smul.u32 %s18, 2
      %s32 = sadd.s32 %s31, %s19
      %s33 = smul.u32 %s30, 2
      %s34 = sadd.s32 %s33, %s26
      %s35 = ssub.s32 %s32, %s34
      %p36 = scmp.eq.s32.totalorder %s35, 0
      %s38 = sadd.s32 %s37, 1
      %s39 = scalar_select %p36, %s37, %s38
      %p42 = pneg %p36
      %p43 = scmp.eq.s32.totalorder %s11, 1
      %p44 = por %p42, %p43
      %p45 = scmp.ne.s32.totalorder %s37, %s40
      %p46 = scmp.eq.s32.totalorder %s11, 0
      %p47 = por %p45, %p46
      %p48 = scmp.ne.s32.totalorder %s37, %s40
      %p49 = scmp.eq.s32.totalorder %s16, 1
      %p50 = por %p48, %p49
      %p51 = scmp.ne.s32.totalorder %s40, %s41
      %p52 = scmp.eq.s32.totalorder %s16, 0
      %p53 = por %p51, %p52
      %p54 = scmp.ne.s32.totalorder %s40, %s41
      %p55 = scmp.eq.s32.totalorder %s17, 1
      %p56 = por %p54, %p55
      %p58 = scmp.ne.s32.totalorder %s41, %s57
      %p59 = scmp.eq.s32.totalorder %s17, 0
      %p60 = por %p58, %p59
      %s61 = ssub.s32 %s18, %s30
      %p62 = scmp.eq.s32.totalorder %s61, 0
      %s64 = sadd.s32 %s63, 1
      %s65 = scalar_select %p62, %s63, %s64
      %p68 = pneg %p62
      %p69 = scmp.eq.s32.totalorder %s11, 1
      %p70 = por %p68, %p69
      %p71 = scmp.ne.s32.totalorder %s63, %s66
      %p72 = scmp.eq.s32.totalorder %s11, 0
      %p73 = por %p71, %p72
      %p74 = scmp.ne.s32.totalorder %s63, %s66
      %p75 = scmp.eq.s32.totalorder %s16, 1
      %p76 = por %p74, %p75
      %p77 = scmp.ne.s32.totalorder %s66, %s67
      %p78 = scmp.eq.s32.totalorder %s16, 0
      %p79 = por %p77, %p78
      %p80 = scmp.ne.s32.totalorder %s66, %s67
      %p81 = scmp.eq.s32.totalorder %s17, 1
      %p82 = por %p80, %p81
      %p84 = scmp.ne.s32.totalorder %s67, %s83
      %p85 = scmp.eq.s32.totalorder %s17, 0
      %p86 = por %p84, %p85
      %p87 = scmp.le.s32.totalorder 1, %s11
      %p88 = scmp.lt.s32.totalorder %s11, 3
      %p89 = pnand %p87, %p88
      %p90 = pneg %p89
      // Predicated region
      $region9: #{tpu_custom_call.1} parent=5 // pred_check
        _
      $region10: #{tpu_custom_call.1} parent=5 // pred_check_branch
        %92 = sbr.rel (%p89) target = $region12
      $region11: #{tpu_custom_call.1} parent=5 // pred_region
        %s93 = ssub.s32 %s11, 1
      $region12: #{tpu_custom_call.1} parent=5 // pred_fallthru
        _
      %p94 = scmp.lt.s32.totalorder %s11, 2
      // Predicated region
      $region13: #{tpu_custom_call.1} parent=5 // pred_check
        %p95 = pneg %p94
      $region14: #{tpu_custom_call.1} parent=5 // pred_check_branch
        %97 = sbr.rel (%p95) target = $region16
      $region15: #{tpu_custom_call.1} parent=5 // pred_region
        // Predicated region
        $region17: #{tpu_custom_call.1} parent=15 // pred_check
          %p98 = pneg %p47
        $region18: #{tpu_custom_call.1} parent=15 // pred_check_branch
          %100 = sbr.rel (%p98) target = $region20
        $region19: #{tpu_custom_call.1} parent=15 // pred_region
          %s101 = sand.u32 %s37, 1
          %s102 = scalar_lea.sflag [#allocation3], %s101
          %s103 = sand.u32 %s37, 1
          %s104 = smul.addr %s103, 8
          %s105 = scalar_lea.vmem [#allocation2], %s104
          %s106 = smul.u32 %s18, 2
          %s107 = sadd.s32 %s106, %s19
          %s109 = ssub.s32 128, 128
          %110 = vsyncadd %s102, %s109
          %s111 = smul.addr %s107, 128
          %s112 = scalar_lea.hbm %s0, %s111
          %s114 = sshll.u32 %s105, 4
          %s115 = int_to_ptr.vmem [resolvable:$true] %s114
          %117 = dma.hbm_to_vmem [thread:$0]  %s112, 128, %s115, %s102
        $region20: #{tpu_custom_call.1} parent=15 // pred_fallthru
          _
      $region16: #{tpu_custom_call.1} parent=5 // pred_fallthru
        _
      %p118 = scmp.le.s32.totalorder 1, %s11
      %p119 = scmp.lt.s32.totalorder %s11, 3
      %p120 = pnand %p118, %p119
      %p121 = pneg %p120
      // Predicated region
      $region21: #{tpu_custom_call.1} parent=5 // pred_check
        _
      $region22: #{tpu_custom_call.1} parent=5 // pred_check_branch
        %123 = sbr.rel (%p120) target = $region24
      $region23: #{tpu_custom_call.1} parent=5 // pred_region
        %s124 = ssub.s32 %s11, 1
        %s125 = sand.u32 %s40, 1
        %s126 = scalar_lea.sflag [#allocation3], %s125
        %s127 = sand.u32 %s40, 1
        %s128 = smul.addr %s127, 8
        %s129 = scalar_lea.vmem [#allocation2], %s128
        // Predicated region
        $region25: #{tpu_custom_call.1} parent=23 // pred_check
          %p130 = pneg %p53
        $region26: #{tpu_custom_call.1} parent=23 // pred_check_branch
          %132 = sbr.rel (%p130) target = $region28
        $region27: #{tpu_custom_call.1} parent=23 // pred_region
          %133 = dma.done %s126, 128
        $region28: #{tpu_custom_call.1} parent=23 // pred_fallthru
          _
        %s134 = sand.u32 %s40, 1
        %s135 = scalar_lea.sflag [#allocation3], %s134
        %s136 = sand.u32 %s40, 1
        %s137 = smul.addr %s136, 8
        %s138 = scalar_lea.vmem [#allocation2], %s137
        %p139 = pneg %p53
        %p140 = pneg %p50
        %p141 = pneg %p79
        %p142 = pneg %p76
        %s143 = smul.u32 %s20, 2
        %s144 = sadd.s32 %s143, %s21
        %p145 = scmp.eq.s32.totalorder %s21, 0
        // Predicated region
        $region29: #{tpu_custom_call.1} parent=23 // pred_check
          %p146 = pneg %p145
        $region30: #{tpu_custom_call.1} parent=23 // pred_check_branch
          %148 = sbr.rel (%p146) target = $region32
        $region31: #{tpu_custom_call.1} parent=23 // pred_region
          %vm149 = vcmask 64512
          %150 = vst.msk [vmem:[#allocation5] sm:$0xff] %vm149, 0.0
        $region32: #{tpu_custom_call.1} parent=23 // pred_fallthru
          _
        %v151 = vld [vmem:[%s129] sm:$0xff]
        %v152 = vld [vmem:[#allocation5] sm:$0xff]
        %153 = vmatprep.subr.mxu0 0.0
        %154 = vmatpush1.xpose.msra.mxu0 0.0
        %155 = vmatprep.subr.mxu0 0.0
        %156 = vmatpush1.xpose.msra.mxu0 0.0
        %157 = vmatprep.subr.mxu0 0.0
        %158 = vmatpush1.xpose.msra.mxu0 0.0
        %159 = vmatprep.subr.mxu0 0.0
        %160 = vmatpush1.xpose.msra.mxu0 0.0
        %161 = vmatprep.subr.mxu0 0.0
        %162 = vmatpush1.xpose.msra.mxu0 0.0
        %163 = vmatprep.subr.mxu0 0.0
        %164 = vmatpush1.xpose.msra.mxu0 0.0
        %165 = vmatprep.subr.mxu0 0.0
        %166 = vmatpush1.xpose.msra.mxu0 0.0
        %167 = vmatprep.subr.mxu0 0.0
        %168 = vmatpush1.xpose.msra.mxu0 0.0
        %169 = vmatprep.subr.mxu0 0.0
        %170 = vmatpush1.xpose.msra.mxu0 0.0
        %171 = vmatprep.subr.mxu0 0.0
        %172 = vmatpush1.xpose.msra.mxu0 0.0
        %173 = vmatprep.subr.mxu0 0.0
        %174 = vmatpush1.xpose.msra.mxu0 0.0
        %175 = vmatprep.subr.mxu0 0.0
        %176 = vmatpush1.xpose.msra.mxu0 0.0
        %177 = vmatprep.subr.mxu0 0.0
        %178 = vmatpush1.xpose.msra.mxu0 0.0
        %179 = vmatprep.subr.mxu0 0.0
        %180 = vmatpush1.xpose.msra.mxu0 0.0
        %181 = vmatprep.subr.mxu0 0.0
        %182 = vmatpush1.xpose.msra.mxu0 0.0
        %183 = vmatprep.subr.mxu0 0.0
        %184 = vmatpush1.xpose.msra.mxu0 %v151
        %185 = vmatprep.subr.mxu0 0.0
        %186 = vmatpush2.xpose.msra.mxu0 0.0
        %187 = vmatprep.subr.mxu0 0.0
        %188 = vmatpush2.xpose.msra.mxu0 0.0
        %189 = vmatprep.subr.mxu0 0.0
        %190 = vmatpush2.xpose.msra.mxu0 0.0
        %191 = vmatprep.subr.mxu0 0.0
        %192 = vmatpush2.xpose.msra.mxu0 0.0
        %193 = vmatprep.subr.mxu0 0.0
        %194 = vmatpush2.xpose.msra.mxu0 0.0
        %195 = vmatprep.subr.mxu0 0.0
        %196 = vmatpush2.xpose.msra.mxu0 0.0
        %197 = vmatprep.subr.mxu0 0.0
        %198 = vmatpush2.xpose.msra.mxu0 0.0
        %199 = vmatprep.subr.mxu0 0.0
        %200 = vmatpush2.xpose.msra.mxu0 0.0
        %201 = vmatprep.subr.mxu0 0.0
        %202 = vmatpush2.xpose.msra.mxu0 0.0
        %203 = vmatprep.subr.mxu0 0.0
        %204 = vmatpush2.xpose.msra.mxu0 0.0
        %205 = vmatprep.subr.mxu0 0.0
        %206 = vmatpush2.xpose.msra.mxu0 0.0
        %207 = vmatprep.subr.mxu0 0.0
        %208 = vmatpush2.xpose.msra.mxu0 0.0
        %209 = vmatprep.subr.mxu0 0.0
        %210 = vmatpush2.xpose.msra.mxu0 0.0
        %211 = vmatprep.subr.mxu0 0.0
        %212 = vmatpush2.xpose.msra.mxu0 0.0
        %213 = vmatprep.subr.mxu0 0.0
        %214 = vmatpush2.xpose.msra.mxu0 0.0
        %215 = vmatprep.subr.mxu0 0.0
        %216 = vmatpush2.xpose.msra.mxu0 0.0
        %217 = vmatprep.mubr.f32.mxu0 0.0
        %218 = vmatmul.mubr.f32.gmra.mxu0 %v151
        %v219 = vpop.f32.mrf.mxu0
        %v220 = vadd.f32 0.0, %v219
        %v221 = vpop.f32.mrf.mxu0
        %222 = vdwg.mxu0
        %v223 = vadd.f32 %v152, %v220
        %vm224 = vcmask 64512
        %225 = vst.msk [vmem:[#allocation5] sm:$0xff] %vm224, %v223
        %p226 = scmp.eq.s32.totalorder %s21, 1
        // Predicated region
        $region33: #{tpu_custom_call.1} parent=23 // pred_check
          %p227 = pneg %p226
        $region34: #{tpu_custom_call.1} parent=23 // pred_check_branch
          %229 = sbr.rel (%p227) target = $region36
        $region35: #{tpu_custom_call.1} parent=23 // pred_region
          %v230 = vld [vmem:[#allocation5] sm:$0xff]
          %v231 = vmul.f32 %v230, 0.00048828125
          %232 = vst.msk [vmem:[#allocation5] sm:$0xff] %vm224, %v231
        $region36: #{tpu_custom_call.1} parent=23 // pred_fallthru
          _
        // Predicated region
        $region37: #{tpu_custom_call.1} parent=23 // pred_check
          %p233 = pneg %p76
        $region38: #{tpu_custom_call.1} parent=23 // pred_check_branch
          %235 = sbr.rel (%p233) target = $region40
        $region39: #{tpu_custom_call.1} parent=23 // pred_region
          %s237 = ssub.s32 128, 128
          %238 = vsyncadd [#allocation4], %s237
          %s239 = smul.addr %s20, 128
          %s240 = scalar_lea.hbm %s1, %s239
          %s242 = sshll.u32 [#allocation5], 4
          %s243 = int_to_ptr.vmem [resolvable:$true] %s242
          %245 = dma.vmem_to_hbm [thread:$0]  %s243, 128, %s240, [#allocation4]
        $region40: #{tpu_custom_call.1} parent=23 // pred_fallthru
          _
        // Predicated region
        $region41: #{tpu_custom_call.1} parent=23 // pred_check
          %p246 = pneg %p76
        $region42: #{tpu_custom_call.1} parent=23 // pred_check_branch
          %248 = sbr.rel (%p246) target = $region44
        $region43: #{tpu_custom_call.1} parent=23 // pred_region
          %249 = dma.done [#allocation4], 128
        $region44: #{tpu_custom_call.1} parent=23 // pred_fallthru
          _
      $region24: #{tpu_custom_call.1} parent=5 // pred_fallthru
        _
      %p250 = scmp.le.s32.totalorder 2, %s11
      // Predicated region
      $region45: #{tpu_custom_call.1} parent=5 // pred_check
        %p251 = pneg %p250
      $region46: #{tpu_custom_call.1} parent=5 // pred_check_branch
        %253 = sbr.rel (%p251) target = $region48
      $region47: #{tpu_custom_call.1} parent=5 // pred_region
        %s254 = ssub.s32 %s11, 2
      $region48: #{tpu_custom_call.1} parent=5 // pred_fallthru
        _
    $region6: #{tpu_custom_call.1} parent=1 // loop_footer
      %s15 = sadd.s32 1, %s11
    $region7: #{tpu_custom_call.1} parent=1 // loop_footer_branch
      %10 = sbr.rel target = $region3
    $region8: #{tpu_custom_call.1} parent=1 // loop_exit
      _
    %255 = vsyncpa [#allocation3], 1
    %s256 = scalar_lea.sflag [#allocation3], 1
    %257 = vsyncpa %s256, 1
    %258 = vsyncpa [#allocation4], 1
    %s259 = scalar_lea.sflag [#allocation4], 1
    %260 = vsyncpa %s259, 1

</llo_original>
